<compile_context>
chip_gen: v7x
topology: tpu7x:2x2x1
jax: 0.10.0
libtpu: 0.0.40
codegen_flags: <defaults>
</compile_context>

<pallas_src>
import functools

import jax
import jax.numpy as jnp
from jax import lax
from jax.experimental import pallas as pl
from jax.experimental.pallas import tpu as pltpu


def _tv_kernel(x_ref, out_ref, *, width):
    # x_ref: (TB, H*W) block of flattened images (lane-dense layout).
    x = x_ref[...].astype(jnp.float32)

    # Vertical differences: flat index j pairs (r, c) with (r+1, c).
    # All positions j < (H-1)*W are valid -> no masking needed.
    dh = x[:, width:] - x[:, :-width]

    # Horizontal differences: flat index j pairs (r, c) with (r, c+1).
    # Positions with (j % W) == W-1 straddle an image-row boundary -> mask out.
    dw = x[:, 1:] - x[:, :-1]
    col = lax.broadcasted_iota(jnp.int32, dw.shape, 1)
    dw = jnp.where((col % width) != (width - 1), dw, 0.0)

    h_sum = jnp.sum(dh * dh)
    w_sum = jnp.sum(dw * dw)

    # One lane-dense (8, 128) output block per grid step:
    # row 0 / lane 0 = vertical partial sum, row 0 / lane 1 = horizontal.
    row = lax.broadcasted_iota(jnp.int32, (8, 128), 0)
    lane = lax.broadcasted_iota(jnp.int32, (8, 128), 1)
    out_ref[...] = jnp.where(
        (row == 0) & (lane == 0), h_sum,
        jnp.where((row == 0) & (lane == 1), w_sum, 0.0),
    )


def tv_loss(x, tv_loss_weight=1.0):
    """Equivalent of TVLoss.forward for NCHW input x."""
    b, c, h, w = x.shape
    bc = b * c
    hw = h * w

    # Lane-dense layout: each (H, W) image becomes one row of length H*W.
    x_flat = x.reshape(bc, hw)

    # Images per block: multiple of 8 (sublane constraint), big enough to
    # amortize per-step overhead, small enough that the f32 working set
    # (double-buffered input + elementwise intermediates) fits VMEM on all chips
    # (v7x has only 64 MiB physical / 32 MiB scoped).
    f32_bytes_per_img = hw * 4
    budget = 4 * 1024 * 1024                      # ~4 MiB of f32 per block
    tb = (budget // f32_bytes_per_img) // 8 * 8
    tb = int(max(8, min(tb, 512)))
    tb = int(min(tb, pl.cdiv(bc, 8) * 8))         # no bigger than (padded) bc

    g = pl.cdiv(bc, tb)
    bc_pad = g * tb
    if bc_pad != bc:
        # Zero padding: padded rows contribute exactly zero to both sums.
        x_flat = jnp.pad(x_flat, ((0, bc_pad - bc), (0, 0)))

    out = pl.pallas_call(
        functools.partial(_tv_kernel, width=w),
        out_shape=jax.ShapeDtypeStruct((g * 8, 128), jnp.float32),
        grid_spec=pltpu.PrefetchScalarGridSpec(
            num_scalar_prefetch=0,
            grid=(g,),
            in_specs=[pl.BlockSpec((tb, hw), lambda i: (i, 0))],
            out_specs=pl.BlockSpec((8, 128), lambda i: (i, 0)),
        ),
        compiler_params=pltpu.CompilerParams(
            dimension_semantics=("parallel",),
            vmem_limit_bytes=32 * 1024 * 1024,
        ),
    )(x_flat)

    h_tv = jnp.sum(out[:, 0])
    w_tv = jnp.sum(out[:, 1])

    count_h = c * (h - 1) * w
    count_w = c * h * (w - 1)
    return tv_loss_weight * 2.0 * (h_tv / count_h + w_tv / count_w) / b


def _tv_loss_ref(x, tv_loss_weight=1.0):
    """Pure-JAX reference mirroring the PyTorch forward."""
    b, c, h, w = x.shape
    count_h = c * (h - 1) * w
    count_w = c * h * (w - 1)
    h_tv = jnp.sum((x[:, :, 1:, :] - x[:, :, :-1, :]) ** 2)
    w_tv = jnp.sum((x[:, :, :, 1:] - x[:, :, :, :-1]) ** 2)
    return tv_loss_weight * 2.0 * (h_tv / count_h + w_tv / count_w) / b


if __name__ == "__main__":
    key = jax.random.PRNGKey(0)
    x = jax.random.normal(key, (2, 4, 16, 16), dtype=jnp.float32)

    out = tv_loss(x, tv_loss_weight=1.0)
    out = jax.block_until_ready(out)

    ref = _tv_loss_ref(x, tv_loss_weight=1.0)
    assert jnp.allclose(out, ref, rtol=1e-5, atol=1e-5), (out, ref)

    print("KERNEL_OK")
</pallas_src>

<mosaic_0001>
module attributes {stable_mosaic.version = 11 : i64} {
  func.func @_tv_kernel(%arg0: i32, %arg1: memref<8x256xf32, #tpu.memory_space<vmem>>, %arg2: memref<8x128xf32, #tpu.memory_space<vmem>>) attributes {dimension_semantics = [#tpu.dimension_semantics<parallel>], iteration_bounds = array<i64: 1>, scalar_prefetch = 0 : i64, scratch_operands = 0 : i64, tpu.core_type = #tpu.core_type<tc>, window_params = [{transform_indices = @transform_0, window_bounds = array<i64: 8, 256>}, {transform_indices = @transform_1, window_bounds = array<i64: 8, 128>}]} {
    %c0 = arith.constant 0 : index
    %c0_0 = arith.constant 0 : index
    %0 = vector.load %arg1[%c0, %c0_0] : memref<8x256xf32, #tpu.memory_space<vmem>>, vector<8x256xf32>
    %1 = vector.extract_strided_slice %0 {offsets = [0, 16], sizes = [8, 240], strides = [1, 1]} : vector<8x256xf32> to vector<8x240xf32>
    %2 = vector.extract_strided_slice %0 {offsets = [0, 0], sizes = [8, 240], strides = [1, 1]} : vector<8x256xf32> to vector<8x240xf32>
    %3 = arith.subf %1, %2 : vector<8x240xf32>
    %4 = vector.extract_strided_slice %0 {offsets = [0, 1], sizes = [8, 255], strides = [1, 1]} : vector<8x256xf32> to vector<8x255xf32>
    %5 = vector.extract_strided_slice %0 {offsets = [0, 0], sizes = [8, 255], strides = [1, 1]} : vector<8x256xf32> to vector<8x255xf32>
    %6 = arith.subf %4, %5 : vector<8x255xf32>
    %7 = tpu.iota {dimensions = array<i32: 1>} : vector<8x255xi32>
    %c16_i32 = arith.constant 16 : i32
    %c0_i32 = arith.constant 0 : i32
    %8 = arith.cmpi eq, %c16_i32, %c0_i32 : i32
    %c1_i32 = arith.constant 1 : i32
    %9 = arith.select %8, %c1_i32, %c16_i32 : i32
    %10 = vector.broadcast %9 : i32 to vector<8x255xi32>
    %11 = arith.remsi %7, %10 : vector<8x255xi32>
    %c0_i32_1 = arith.constant 0 : i32
    %12 = vector.broadcast %c0_i32_1 : i32 to vector<8x255xi32>
    %13 = arith.cmpi ne, %11, %12 : vector<8x255xi32>
    %c0_i32_2 = arith.constant 0 : i32
    %14 = vector.broadcast %c0_i32_2 : i32 to vector<8x255xi32>
    %15 = arith.cmpi slt, %11, %14 : vector<8x255xi32>
    %c0_i32_3 = arith.constant 0 : i32
    %16 = arith.cmpi slt, %9, %c0_i32_3 : i32
    %17 = vector.broadcast %16 : i1 to vector<8x255xi1>
    %18 = vector.broadcast %17 : vector<8x255xi1> to vector<8x255xi1>
    %19 = arith.xori %15, %18 : vector<8x255xi1>
    %20 = arith.andi %19, %13 : vector<8x255xi1>
    %21 = vector.broadcast %9 : i32 to vector<8x255xi32>
    %22 = arith.addi %11, %21 : vector<8x255xi32>
    %23 = arith.select %20, %22, %11 : vector<8x255xi1>, vector<8x255xi32>
    %c15_i32 = arith.constant 15 : i32
    %24 = vector.broadcast %c15_i32 : i32 to vector<8x255xi32>
    %25 = arith.cmpi ne, %23, %24 : vector<8x255xi32>
    %cst = arith.constant 0.000000e+00 : f32
    %26 = vector.broadcast %cst : f32 to vector<8x255xf32>
    %27 = arith.select %25, %6, %26 : vector<8x255xi1>, vector<8x255xf32>
    %28 = arith.mulf %3, %3 : vector<8x240xf32>
    %29 = vector.shape_cast %28 : vector<8x240xf32> to vector<1x8x240xf32>
    %cst_4 = arith.constant dense<0.000000e+00> : vector<1xf32>
    %30 = vector.multi_reduction <add>, %29, %cst_4 [1, 2] : vector<1x8x240xf32> to vector<1xf32>
    %31 = vector.shape_cast %30 : vector<1xf32> to vector<1x1x1xf32>
    %32 = vector.extract %31[0, 0, 0] : f32 from vector<1x1x1xf32>
    %33 = arith.mulf %27, %27 : vector<8x255xf32>
    %34 = vector.shape_cast %33 : vector<8x255xf32> to vector<1x8x255xf32>
    %cst_5 = arith.constant dense<0.000000e+00> : vector<1xf32>
    %35 = vector.multi_reduction <add>, %34, %cst_5 [1, 2] : vector<1x8x255xf32> to vector<1xf32>
    %36 = vector.shape_cast %35 : vector<1xf32> to vector<1x1x1xf32>
    %37 = vector.extract %36[0, 0, 0] : f32 from vector<1x1x1xf32>
    %38 = tpu.iota {dimensions = array<i32: 0>} : vector<8x128xi32>
    %39 = tpu.iota {dimensions = array<i32: 1>} : vector<8x128xi32>
    %c0_i32_6 = arith.constant 0 : i32
    %40 = vector.broadcast %c0_i32_6 : i32 to vector<8x128xi32>
    %41 = arith.cmpi eq, %38, %40 : vector<8x128xi32>
    %c0_i32_7 = arith.constant 0 : i32
    %42 = vector.broadcast %c0_i32_7 : i32 to vector<8x128xi32>
    %43 = arith.cmpi eq, %39, %42 : vector<8x128xi32>
    %44 = arith.andi %41, %43 : vector<8x128xi1>
    %c0_i32_8 = arith.constant 0 : i32
    %45 = vector.broadcast %c0_i32_8 : i32 to vector<8x128xi32>
    %46 = arith.cmpi eq, %38, %45 : vector<8x128xi32>
    %c1_i32_9 = arith.constant 1 : i32
    %47 = vector.broadcast %c1_i32_9 : i32 to vector<8x128xi32>
    %48 = arith.cmpi eq, %39, %47 : vector<8x128xi32>
    %49 = arith.andi %46, %48 : vector<8x128xi1>
    %cst_10 = arith.constant 0.000000e+00 : f32
    %50 = vector.broadcast %37 : f32 to vector<8x128xf32>
    %51 = vector.broadcast %cst_10 : f32 to vector<8x128xf32>
    %52 = arith.select %49, %50, %51 : vector<8x128xi1>, vector<8x128xf32>
    %53 = vector.broadcast %32 : f32 to vector<8x128xf32>
    %54 = arith.select %44, %53, %52 : vector<8x128xi1>, vector<8x128xf32>
    %c0_11 = arith.constant 0 : index
    %c0_12 = arith.constant 0 : index
    %55 = vector.load %arg2[%c0_11, %c0_12] : memref<8x128xf32, #tpu.memory_space<vmem>>, vector<8x128xf32>
    tpu.vector_store %arg2[%c0_11, %c0_12], %54 {strides = array<i32>} : memref<8x128xf32, #tpu.memory_space<vmem>>, vector<8x128xf32>,
    return
  }
  func.func @transform_0(%arg0: i32) -> (i32, i32) {
    %c0_i32 = arith.constant 0 : i32
    %c0_i32_0 = arith.constant 0 : i32
    return %arg0, %c0_i32 : i32, i32
  }
  func.func @transform_1(%arg0: i32) -> (i32, i32) {
    %c0_i32 = arith.constant 0 : i32
    %c0_i32_0 = arith.constant 0 : i32
    return %arg0, %c0_i32 : i32, i32
  }
}

</mosaic_0001>

<llo_original>
// kernel: tpu_custom_call.1
$region0: #{tpu_custom_call.1}
  #allocation0 [shape = 'u32[]', space=smem, size = 0x4, offset = 0x4, fixed_abs, tag = 'smem constant byte address 0x4 - core index']
  #allocation1 [shape = 'u32[144,128]{1,0:T(1,128)}', space=vmem, size = 0x12000, scoped, tag = 'internal scratch']
  %s0 = inlined_call_operand.hbm [shape: f32[8,256], index: 0, kind: input, shape index: {}]
  %s1 = inlined_call_operand.hbm [shape: f32[8,128], index: 1, kind: output, shape index: {}]
  %s2 = sld [smem:[#allocation0]]
  $region18: #{tpu_custom_call.1} parent=0
    _
  %s4 = ssub.s32 1, %s2
  %s5 = scalar_select 0, %s4, %s2
  $region1: #{tpu_custom_call.1} parent=0
    #allocation2 [shape = 'u8[8192]{0}', space=vmem, size = 0x2000, scoped, tag = 'input window, operand 0, single buffered']
    #allocation3 [shape = 's32[1]{0}', space=sflag, size = 0x4, scoped, tag = 'scoped memory for tpu_custom_call.1']
    #allocation4 [shape = 's32[1]{0}', space=sflag, size = 0x4, scoped, tag = 'scoped memory for tpu_custom_call.1']
    #allocation5 [shape = 'u8[4096]{0}', space=vmem, size = 0x1000, scoped, tag = 'output window, operand 0, single buffered']
    %6 = vsyncpa [#allocation3], 0
    %7 = vsyncpa [#allocation4], 0
    // Predicated region
    $region2: #{tpu_custom_call.1} parent=1 // pred_check
      _
    $region3: #{tpu_custom_call.1} parent=1 // pred_check_branch
      %9 = sbr.rel (0) target = $region5
    $region4: #{tpu_custom_call.1} parent=1 // pred_region
      %s11 = ssub.s32 256, 256
      %12 = vsyncadd [#allocation3], %s11
      %s14 = sshll.u32 [#allocation2], 4
      %s15 = int_to_ptr.vmem [resolvable:$true] %s14
      %17 = dma.hbm_to_vmem [thread:$0]  %s0, 256, %s15, [#allocation3]
    $region5: #{tpu_custom_call.1} parent=1 // pred_fallthru
      _
    // Predicated region
    $region6: #{tpu_custom_call.1} parent=1 // pred_check
      _
    $region7: #{tpu_custom_call.1} parent=1 // pred_check_branch
      %19 = sbr.rel (0) target = $region9
    $region8: #{tpu_custom_call.1} parent=1 // pred_region
      %20 = dma.done [#allocation3], 256
    $region9: #{tpu_custom_call.1} parent=1 // pred_fallthru
      _
    %v21 = vld [vmem:[#allocation2] sm:$0xff]
    %v22 = vld [vmem:[#allocation2 + $0x8] sm:$0xff]
    %25 = vrot.lane.b32.xlu0 %v21, 16
    %v26 = vpop.permute.xlu0 %25
    %27 = vrot.lane.b32.xlu0 %v22, 16
    %v28 = vpop.permute.xlu0 %27
    %vm29 = vcmask 130048
    %v30 = vsel %vm29, %v26, %v28
    %v33 = vsub.f32 %v21, %v26
    %v34 = vsub.f32 %v22, %v30
    %35 = vrot.lane.b32.xlu0 %v21, 1
    %v36 = vpop.permute.xlu0 %35
    %37 = vrot.lane.b32.xlu0 %v22, 1
    %v38 = vpop.permute.xlu0 %37
    %vm39 = vcmask 7168
    %v40 = vsel %vm39, %v36, %v38
    %v43 = vsub.f32 %v21, %v36
    %v44 = vsub.f32 %v22, %v40
    %v45 = vlaneseq
    %v46 = vand.u32 %v45, 127
    %v47 = vadd.s32 %v46, 128
    %vm48 = vcmp.lt.s32.totalorder %v46, 0
    %v49 = vsub.s32 0, %v46
    %v50 = vsel %vm48, %v49, %v46
    %v51 = vshrl.u32 %v50, 4
    %v52 = vand.u32 %v50, 15
    %v53 = vsub.s32 0, %v52
    %v54 = vsel %vm48, %v53, %v52
    %vm55 = vcmp.lt.s32.totalorder %v47, 0
    %v56 = vsub.s32 0, %v47
    %v57 = vsel %vm55, %v56, %v47
    %v58 = vshrl.u32 %v57, 4
    %v59 = vand.u32 %v57, 15
    %v60 = vsub.s32 0, %v59
    %v61 = vsel %vm55, %v60, %v59
    %vm62 = vcmp.ne.s32.totalorder %v54, 0
    %vm63 = vcmp.ne.s32.totalorder %v61, 0
    %vm64 = vcmp.lt.s32.totalorder %v54, 0
    %vm65 = vcmp.lt.s32.totalorder %v61, 0
    %vm66 = vmand %vm64, %vm62
    %vm67 = vmand %vm65, %vm63
    %v68 = vadd.s32 %v54, 16
    %v69 = vadd.s32 %v61, 16
    %v70 = vsel %vm66, %v68, %v54
    %v71 = vsel %vm67, %v69, %v61
    %vm72 = vcmp.ne.s32.totalorder %v70, 15
    %vm73 = vcmp.ne.s32.totalorder %v71, 15
    %76 = vrot.lane.b32.xlu0 %v43, 127
    %v77 = vpop.permute.xlu0 %76
    %78 = vrot.lane.b32.xlu0 %v44, 127
    %v79 = vpop.permute.xlu0 %78
    %vm80 = vcmask 1039360
    %v81 = vsel %vm80, %v77, %v79
    %v84 = vsel %vm72, %v81, 0.0
    %v85 = vsel %vm73, %v79, 0.0
    %v86 = vmul.f32 %v33, %v33
    %v87 = vmul.f32 %v34, %v34
    %90 = vrot.lane.b32.xlu0 %v86, 112
    %v91 = vpop.permute.xlu0 %90
    %92 = vrot.lane.b32.xlu0 %v87, 112
    %v93 = vpop.permute.xlu0 %92
    %vm94 = vcmask 916480
    %v95 = vsel %vm94, %v91, %v93
    %v98 = vsel %vm94, %v93, 0.0
    %v99 = vadd.f32 %v95, %v98
    %100 = vadd.xlane.f32.xlu0 %v99
    %v101 = vpop.xlane.xlu0 %100
    %v102 = vrot.slane %v101, 4
    %v103 = vadd.f32 %v101, %v102
    %v104 = vrot.slane %v103, 2
    %v105 = vadd.f32 %v103, %v104
    %v106 = vrot.slane %v105, 1
    %v107 = vadd.f32 %v105, %v106
    %s108 = vtos %v107
    %v109 = vmul.f32 %v84, %v84
    %v110 = vmul.f32 %v85, %v85
    %v111 = vsel %vm80, %v110, 0.0
    %v112 = vadd.f32 %v109, %v111
    %113 = vadd.xlane.f32.xlu0 %v112
    %v114 = vpop.xlane.xlu0 %113
    %v115 = vrot.slane %v114, 4
    %v116 = vadd.f32 %v114, %v115
    %v117 = vrot.slane %v116, 2
    %v118 = vadd.f32 %v116, %v117
    %v119 = vrot.slane %v118, 1
    %v120 = vadd.f32 %v118, %v119
    %s121 = vtos %v120
    %v122 = vlaneseq
    %v123 = vshrl.u32 %v122, 7
    %vm124 = vcmp.eq.s32.totalorder %v123, 0
    %vm125 = vcmp.eq.s32.totalorder %v46, 0
    %vm126 = vmand %vm124, %vm125
    %vm127 = vcmp.eq.s32.totalorder %v46, 1
    %vm128 = vmand %vm124, %vm127
    %v129 = vstv %s121
    %v130 = vsel %vm128, %v129, 0.0
    %v131 = vstv %s108
    %v132 = vsel %vm126, %v131, %v130
    %133 = vst [vmem:[#allocation5] sm:$0xff] %v132
    // Predicated region
    $region10: #{tpu_custom_call.1} parent=1 // pred_check
      _
    $region11: #{tpu_custom_call.1} parent=1 // pred_check_branch
      %135 = sbr.rel (0) target = $region13
    $region12: #{tpu_custom_call.1} parent=1 // pred_region
      %s137 = ssub.s32 128, 128
      %138 = vsyncadd [#allocation4], %s137
      %s140 = sshll.u32 [#allocation5], 4
      %s141 = int_to_ptr.vmem [resolvable:$true] %s140
      %143 = dma.vmem_to_hbm [thread:$0]  %s141, 128, %s1, [#allocation4]
    $region13: #{tpu_custom_call.1} parent=1 // pred_fallthru
      _
    // Predicated region
    $region14: #{tpu_custom_call.1} parent=1 // pred_check
      _
    $region15: #{tpu_custom_call.1} parent=1 // pred_check_branch
      %145 = sbr.rel (0) target = $region17
    $region16: #{tpu_custom_call.1} parent=1 // pred_region
      %146 = dma.done [#allocation4], 128
    $region17: #{tpu_custom_call.1} parent=1 // pred_fallthru
      _
    %147 = vsyncpa [#allocation3], 1
    %148 = vsyncpa [#allocation4], 1

</llo_original>
